<compile_context>
chip_gen: v5e
topology: v5e:2x2
jax: 0.10.0
libtpu: 0.0.40
codegen_flags: <defaults>
</compile_context>

<pallas_src>
import functools

import jax
import jax.numpy as jnp
from jax.experimental import pallas as pl
from jax.experimental.pallas import tpu as pltpu


def _round_up(n, m):
    return ((n + m - 1) // m) * m


def _st_pool_kernel(x_ref, mean_ref, std_ref, *scratch, t_total, n_slabs,
                    last_slabs, last_valid, row_chunk, multi_k):
    r_tile = x_ref.shape[0]
    n_chunks = r_tile // row_chunk

    def fold_chunk(r0, slab_limit, boundary_valid):
        """Fold `slab_limit` 128-lane slabs of rows [r0, r0+row_chunk) into
        f32 register partials (sum, sum of squares) of shape (row_chunk, 128).
        Only the boundary slab (if any) is masked; OOB slabs are never loaded."""
        ps = pq = None
        for j in range(slab_limit):
            s = x_ref[pl.ds(r0, row_chunk), pl.ds(j * 128, 128)]
            s = s.astype(jnp.float32)
            if boundary_valid is not None and j == slab_limit - 1:
                lane = jax.lax.broadcasted_iota(jnp.int32, s.shape, 1)
                s = jnp.where(lane < boundary_valid, s, 0.0)
            if ps is None:
                ps, pq = s, s * s
            else:
                ps, pq = ps + s, pq + s * s
        return ps, pq

    def finalize(s, ss):
        """mean / unbiased std from per-row sum and sum-of-squares, (rows, 1)."""
        n = jnp.float32(t_total)
        mean = s / n
        # Unbiased variance (torch.std default). T == 1 -> 0/0 -> NaN, matching
        # torch.std(correction=1).
        var = (ss - s * mean) / jnp.float32(t_total - 1)
        var = jnp.maximum(var, 0.0)   # guard tiny negatives from cancellation
        return mean, jnp.sqrt(var)

    def for_each_chunk(chunk_fn):
        if n_chunks == 1:
            chunk_fn(0)
        else:
            def body(ci, carry):
                chunk_fn(pl.multiple_of(ci * row_chunk, row_chunk))
                return carry
            jax.lax.fori_loop(0, n_chunks, body, 0, unroll=(n_chunks <= 16))

    if not multi_k:
        # Single T tile: fold + reduce + finalize + store per row chunk;
        # no VMEM accumulator scratch at all.
        def chunk(r0):
            ps, pq = fold_chunk(r0, last_slabs, last_valid)
            s = jnp.sum(ps, axis=-1, keepdims=True)
            ss = jnp.sum(pq, axis=-1, keepdims=True)
            mean, std = finalize(s, ss)
            mean_ref[pl.ds(r0, row_chunk), :] = mean.astype(mean_ref.dtype)
            std_ref[pl.ds(r0, row_chunk), :] = std.astype(std_ref.dtype)
        for_each_chunk(chunk)
        return

    # Multi T tile: carry narrow (r_tile, 128) f32 partials across k steps.
    sum_ref, ssq_ref = scratch
    k = pl.program_id(1)
    n_k = pl.num_programs(1)

    @pl.when(k == 0)
    def _():
        sum_ref[...] = jnp.zeros_like(sum_ref)
        ssq_ref[...] = jnp.zeros_like(ssq_ref)

    def accum(slab_limit, boundary_valid):
        def chunk(r0):
            ps, pq = fold_chunk(r0, slab_limit, boundary_valid)
            sum_ref[pl.ds(r0, row_chunk), :] += ps
            ssq_ref[pl.ds(r0, row_chunk), :] += pq
        for_each_chunk(chunk)

    if last_slabs == n_slabs and last_valid is None:
        # T is a multiple of t_tile: identical unmasked work on every step.
        accum(n_slabs, None)
    else:
        @pl.when(k < n_k - 1)
        def _():
            accum(n_slabs, None)

        @pl.when(k == n_k - 1)
        def _():
            accum(last_slabs, last_valid)

    @pl.when(k == n_k - 1)
    def _():
        # One XLU reduce of the narrow slabs per row tile.
        s = jnp.sum(sum_ref[...], axis=-1, keepdims=True)
        ss = jnp.sum(ssq_ref[...], axis=-1, keepdims=True)
        mean, std = finalize(s, ss)
        mean_ref[...] = mean.astype(mean_ref.dtype)
        std_ref[...] = std.astype(std_ref.dtype)


def _select_tiles(R, T, itemsize, r_tile, t_tile):
    """Pick (r_tile, t_tile, row_chunk) honoring the (8,128) rule, a ~4 MiB
    per-step input tile, and >= 2 row tiles (two-TensorCore sharding on v7x)."""
    sub = 16 if itemsize < 4 else 8
    r_pad = _round_up(R, sub)
    t_pad = _round_up(T, 128)

    # Lane (reduction) tile.
    if t_tile is None:
        t_tile = 4096 if itemsize < 4 else 2048
    t_tile = min(_round_up(t_tile, 128), t_pad)

    auto_r = r_tile is None
    if auto_r:
        target_bytes = 4 * 1024 * 1024
        r_tile = max(sub, (target_bytes // (t_tile * itemsize)) // sub * sub)
    r_tile = min(_round_up(r_tile, sub), r_pad)
    if auto_r:
        if r_tile >= 64:
            r_tile = max(64, (r_tile // 64) * 64)     # keep 64-row chunks
        if r_pad > sub and pl.cdiv(R, r_tile) < 2:
            half = _round_up(pl.cdiv(r_pad, 2), sub)
            if half >= 64:
                half = _round_up(half, 64)
            r_tile = max(sub, min(half, r_pad))

    # Row chunk: largest multiple of `sub` <= 64 that divides r_tile (keeps the
    # per-chunk register accumulators comfortably inside the 64-vreg file).
    row_chunk = max(sub, min(64, (r_tile // sub) * sub))
    while row_chunk > sub and r_tile % row_chunk != 0:
        row_chunk -= sub

    return r_tile, t_tile, row_chunk


def st_pool_layer(x, *, r_tile=None, t_tile=None):
    """x: (B, C, T) -> (B, 2*C) = concat([mean over T, unbiased std over T], -1)."""
    B, C, T = x.shape
    R = B * C
    xf = x.reshape(R, T)
    itemsize = x.dtype.itemsize

    r_tile, t_tile, row_chunk = _select_tiles(R, T, itemsize, r_tile, t_tile)

    n_r_tiles = pl.cdiv(R, r_tile)
    n_t_tiles = pl.cdiv(T, t_tile)
    grid = (n_r_tiles, n_t_tiles)

    n_slabs = t_tile // 128
    t_rem = T - (n_t_tiles - 1) * t_tile        # elements in the last T tile
    last_slabs = pl.cdiv(t_rem, 128)            # slabs of the last tile holding data
    lv = t_rem - (last_slabs - 1) * 128
    last_valid = None if lv == 128 else lv      # valid lanes in the boundary slab
    multi_k = n_t_tiles > 1

    kernel = functools.partial(
        _st_pool_kernel, t_total=T, n_slabs=n_slabs, last_slabs=last_slabs,
        last_valid=last_valid, row_chunk=row_chunk, multi_k=multi_k)

    scratch_shapes = []
    if multi_k:
        scratch_shapes = [pltpu.VMEM((r_tile, 128), jnp.float32),   # running sum
                          pltpu.VMEM((r_tile, 128), jnp.float32)]   # running sum of squares

    out_shapes = (
        jax.ShapeDtypeStruct((R, 1), x.dtype),   # mean
        jax.ShapeDtypeStruct((R, 1), x.dtype),   # std
    )

    mean, std = pl.pallas_call(
        kernel,
        out_shape=out_shapes,
        grid_spec=pltpu.PrefetchScalarGridSpec(
            num_scalar_prefetch=0,
            grid=grid,
            in_specs=[pl.BlockSpec((r_tile, t_tile), lambda i, k: (i, k))],
            out_specs=[
                pl.BlockSpec((r_tile, 1), lambda i, k: (i, 0)),   # resident over k
                pl.BlockSpec((r_tile, 1), lambda i, k: (i, 0)),
            ],
            scratch_shapes=scratch_shapes,
        ),
        compiler_params=pltpu.CompilerParams(
            dimension_semantics=("parallel", "arbitrary"),
            vmem_limit_bytes=48 * 1024 * 1024,
        ),
        cost_estimate=pl.CostEstimate(
            flops=3 * R * T,
            transcendentals=0,
            bytes_accessed=R * T * itemsize + 2 * R * itemsize,
        ),
    )(xf)

    mean = mean.reshape(B, C)
    std = std.reshape(B, C)
    return jnp.concatenate([mean, std], axis=-1)


def _reference(x):
    """Pure-JAX reference matching torch.mean / torch.std (unbiased) semantics."""
    T = x.shape[2]
    mean = jnp.mean(x, axis=2)
    var = jnp.sum((x - mean[..., None]) ** 2, axis=2) / (T - 1)
    return jnp.concatenate([mean, jnp.sqrt(var)], axis=-1)


if __name__ == "__main__":
    key = jax.random.PRNGKey(0)
    k1, k2, k3, k4 = jax.random.split(key, 4)

    # 1) Tiny shape (single row tile, single T tile, ragged T < 128).
    x1 = jax.random.normal(k1, (2, 4, 16), dtype=jnp.float32)
    o1 = jax.block_until_ready(st_pool_layer(x1))
    assert o1.shape == (2, 8)
    assert jnp.allclose(o1, _reference(x1), atol=1e-5, rtol=1e-5)

    # 2) Explicit small tiles: multiple row tiles and multiple T tiles with a
    #    ragged (masked) last T tile and a ragged row dimension.
    x2 = jax.random.normal(k2, (3, 17, 300), dtype=jnp.float32)
    o2 = jax.block_until_ready(st_pool_layer(x2, r_tile=16, t_tile=128))
    assert o2.shape == (3, 34)
    assert jnp.allclose(o2, _reference(x2), atol=1e-4, rtol=1e-4)

    # 3) Default (auto) tiles: single T tile, two row tiles (v7x 2-TC split),
    #    boundary-slab masking only.
    x3 = jax.random.normal(k3, (2, 64, 400), dtype=jnp.float32)
    o3 = jax.block_until_ready(st_pool_layer(x3))
    assert o3.shape == (2, 128)
    assert jnp.allclose(o3, _reference(x3), atol=1e-4, rtol=1e-4)

    # 4) Multi T tile, exactly aligned: no masking ops emitted at all.
    x4 = jax.random.normal(k4, (2, 8, 256), dtype=jnp.float32)
    o4 = jax.block_until_ready(st_pool_layer(x4, t_tile=128))
    assert o4.shape == (2, 16)
    assert jnp.allclose(o4, _reference(x4), atol=1e-4, rtol=1e-4)

    print("KERNEL_OK")
</pallas_src>

<mosaic_0001>
module attributes {stable_mosaic.version = 11 : i64} {
  func.func @_st_pool_kernel(%arg0: i32, %arg1: i32, %arg2: memref<8x128xf32, #tpu.memory_space<vmem>>, %arg3: memref<8x1xf32, #tpu.memory_space<vmem>>, %arg4: memref<8x1xf32, #tpu.memory_space<vmem>>) attributes {dimension_semantics = [#tpu.dimension_semantics<parallel>, #tpu.dimension_semantics<arbitrary>], iteration_bounds = array<i64: 1, 1>, scalar_prefetch = 0 : i64, scratch_operands = 0 : i64, tpu.core_type = #tpu.core_type<tc>, window_params = [{transform_indices = @transform_0, window_bounds = array<i64: 8, 128>}, {transform_indices = @transform_1, window_bounds = array<i64: 8, 1>}, {transform_indices = @transform_2, window_bounds = array<i64: 8, 1>}]} {
    %c0 = arith.constant 0 : index
    %c0_0 = arith.constant 0 : index
    %0 = vector.load %arg2[%c0, %c0_0] : memref<8x128xf32, #tpu.memory_space<vmem>>, vector<8x128xf32>
    %1 = tpu.iota {dimensions = array<i32: 1>} : vector<8x128xi32>
    %c16_i32 = arith.constant 16 : i32
    %2 = vector.broadcast %c16_i32 : i32 to vector<8x128xi32>
    %3 = arith.cmpi slt, %1, %2 : vector<8x128xi32>
    %cst = arith.constant 0.000000e+00 : f32
    %4 = vector.broadcast %cst : f32 to vector<8x128xf32>
    %5 = arith.select %3, %0, %4 : vector<8x128xi1>, vector<8x128xf32>
    %6 = arith.mulf %5, %5 : vector<8x128xf32>
    %cst_1 = arith.constant dense<0.000000e+00> : vector<8xf32>
    %7 = vector.multi_reduction <add>, %5, %cst_1 [1] : vector<8x128xf32> to vector<8xf32>
    %8 = vector.shape_cast %7 : vector<8xf32> to vector<8x1xf32>
    %cst_2 = arith.constant dense<0.000000e+00> : vector<8xf32>
    %9 = vector.multi_reduction <add>, %6, %cst_2 [1] : vector<8x128xf32> to vector<8xf32>
    %10 = vector.shape_cast %9 : vector<8xf32> to vector<8x1xf32>
    %cst_3 = arith.constant 1.600000e+01 : f32
    %11 = vector.broadcast %cst_3 : f32 to vector<8x1xf32>
    %12 = arith.divf %8, %11 : vector<8x1xf32>
    %13 = arith.mulf %8, %12 : vector<8x1xf32>
    %14 = arith.subf %10, %13 : vector<8x1xf32>
    %cst_4 = arith.constant 1.500000e+01 : f32
    %15 = vector.broadcast %cst_4 : f32 to vector<8x1xf32>
    %16 = arith.divf %14, %15 : vector<8x1xf32>
    %cst_5 = arith.constant 0.000000e+00 : f32
    %17 = vector.broadcast %cst_5 : f32 to vector<8x1xf32>
    %18 = arith.maximumf %16, %17 : vector<8x1xf32>
    %19 = math.sqrt %18 : vector<8x1xf32>
    %c0_6 = arith.constant 0 : index
    %c0_7 = arith.constant 0 : index
    %20 = vector.load %arg3[%c0_6, %c0_7] : memref<8x1xf32, #tpu.memory_space<vmem>>, vector<8x1xf32>
    tpu.vector_store %arg3[%c0_6, %c0_7], %12 {strides = array<i32>} : memref<8x1xf32, #tpu.memory_space<vmem>>, vector<8x1xf32>,
    %c0_8 = arith.constant 0 : index
    %c0_9 = arith.constant 0 : index
    %21 = vector.load %arg4[%c0_8, %c0_9] : memref<8x1xf32, #tpu.memory_space<vmem>>, vector<8x1xf32>
    tpu.vector_store %arg4[%c0_8, %c0_9], %19 {strides = array<i32>} : memref<8x1xf32, #tpu.memory_space<vmem>>, vector<8x1xf32>,
    return
  }
  func.func @transform_0(%arg0: i32, %arg1: i32) -> (i32, i32) {
    %c0_i32 = arith.constant 0 : i32
    return %arg0, %arg1 : i32, i32
  }
  func.func @transform_1(%arg0: i32, %arg1: i32) -> (i32, i32) {
    %c0_i32 = arith.constant 0 : i32
    %c0_i32_0 = arith.constant 0 : i32
    return %arg0, %c0_i32 : i32, i32
  }
  func.func @transform_2(%arg0: i32, %arg1: i32) -> (i32, i32) {
    %c0_i32 = arith.constant 0 : i32
    %c0_i32_0 = arith.constant 0 : i32
    return %arg0, %c0_i32 : i32, i32
  }
}

</mosaic_0001>

<llo_original>
// kernel: tpu_custom_call.1
$region0: #{tpu_custom_call.1}
  #allocation0 [shape = 'u32[]', space=smem, size = 0x4, offset = 0x4, fixed_abs, tag = 'smem constant byte address 0x4 - core index']
  #allocation1 [shape = 'u32[72,128]{1,0:T(1,128)}', space=vmem, size = 0x9000, scoped, tag = 'internal scratch']
  %s0 = inlined_call_operand.hbm [shape: f32[8,16], index: 0, kind: input, shape index: {}]
  %s1 = inlined_call_operand.vmem [shape: f32[8,1], index: 1, kind: output, shape index: {0}]
  %s2 = inlined_call_operand.vmem [shape: f32[8,1], index: 2, kind: output, shape index: {1}]
  %3 = xla_tuple %s1, %s2
  %s4 = sld [smem:[#allocation0]]
  $region26: #{tpu_custom_call.1} parent=0
    _
  %s6 = ssub.s32 1, %s4
  %s7 = scalar_select 0, %s6, %s4
  $region1: #{tpu_custom_call.1} parent=0
    #allocation2 [shape = 'u8[4096]{0}', space=vmem, size = 0x1000, scoped, tag = 'input window, operand 0, single buffered']
    #allocation3 [shape = 's32[1]{0}', space=sflag, size = 0x4, scoped, tag = 'scoped memory for tpu_custom_call.1']
    %8 = vsyncpa [#allocation3], 0
    // Predicated region
    $region2: #{tpu_custom_call.1} parent=1 // pred_check
      _
    $region3: #{tpu_custom_call.1} parent=1 // pred_check_branch
      %10 = sbr.rel (0) target = $region5
    $region4: #{tpu_custom_call.1} parent=1 // pred_region
      %12 = vsyncadd [#allocation3], 0
      %s14 = sshll.u32 %s0, 4
      %s15 = int_to_ptr.hbm [resolvable:$true] %s14
      %s16 = sshll.u32 [#allocation2], 4
      %s17 = int_to_ptr.vmem [resolvable:$true] %s16
      %19 = dma.hbm_to_vmem [thread:$0]  %s15, 128, %s17, [#allocation3]
    $region5: #{tpu_custom_call.1} parent=1 // pred_fallthru
      _
    // Predicated region
    $region6: #{tpu_custom_call.1} parent=1 // pred_check
      _
    $region7: #{tpu_custom_call.1} parent=1 // pred_check_branch
      %21 = sbr.rel (0) target = $region9
    $region8: #{tpu_custom_call.1} parent=1 // pred_region
      %23 = dma.done [#allocation3], 128
    $region9: #{tpu_custom_call.1} parent=1 // pred_fallthru
      _
    %v24 = vld [vmem:[#allocation2] sm:$0xff]
    %v25 = vlaneseq
    %v26 = vand.u32 %v25, 127
    %vm27 = vcmp.lt.s32.totalorder %v26, 16
    %v28 = vsel %vm27, %v24, 0.0
    %v29 = vmul.f32 %v28, %v28
    %30 = vadd.xlane.f32.xlu0 %v28
    %v31 = vpop.xlane.xlu0 %30
    %32 = vadd.xlane.f32.xlu0 %v29
    %v33 = vpop.xlane.xlu0 %32
    %v34 = vrcp.pop 16.0
    %v35 = vmul.f32 16.0, %v34
    %v36 = vsub.f32 1.0, %v35
    %v37 = vmul.f32 %v34, %v36
    %v38 = vadd.f32 %v34, %v37
    %vm39 = vweird.f32 %v34
    %v40 = vsel %vm39, %v34, %v38
    %v41 = vmul.f32 %v31, %v40
    %v42 = vmul.f32 %v31, %v41
    %v43 = vsub.f32 %v33, %v42
    %v44 = vrcp.pop 15.0
    %v45 = vmul.f32 15.0, %v44
    %v46 = vsub.f32 1.0, %v45
    %v47 = vmul.f32 %v44, %v46
    %v48 = vadd.f32 %v44, %v47
    %vm49 = vweird.f32 %v44
    %v50 = vsel %vm49, %v44, %v48
    %v51 = vmul.f32 %v43, %v50
    %v52 = vmax.f32 %v51, 0.0
    %v53 = vrsqrt.pop %v52
    %v54 = vmul.f32 %v53, %v52
    %v55 = vmul.f32 %v54, %v53
    %v56 = vmul.f32 0.5, %v55
    %v57 = vsub.f32 1.5, %v56
    %v58 = vmul.f32 %v53, %v57
    %v59 = vmul.f32 %v52, %v58
    %vm60 = vcmp.eq.f32.partialorder %v52, inf
    %v61 = vsel %vm60, %v52, %v59
    %vm62 = vcmp.eq.f32.partialorder %v52, 0.0
    %v63 = vand.u32 %v52, 2147483648
    %v64 = vsel %vm62, %v63, %v61
    %vm65 = vcmask 7168
    %66 = vst.msk [vmem:[%s1] sm:$0xff] %vm65, %v41
    %67 = vst.msk [vmem:[%s2] sm:$0xff] %vm65, %v64
    // Predicated region
    $region10: #{tpu_custom_call.1} parent=1 // pred_check
      _
    $region11: #{tpu_custom_call.1} parent=1 // pred_check_branch
      %69 = sbr.rel (0) target = $region13
    $region12: #{tpu_custom_call.1} parent=1 // pred_region
      _
    $region13: #{tpu_custom_call.1} parent=1 // pred_fallthru
      _
    // Predicated region
    $region14: #{tpu_custom_call.1} parent=1 // pred_check
      _
    $region15: #{tpu_custom_call.1} parent=1 // pred_check_branch
      %71 = sbr.rel (0) target = $region17
    $region16: #{tpu_custom_call.1} parent=1 // pred_region
      _
    $region17: #{tpu_custom_call.1} parent=1 // pred_fallthru
      _
    // Predicated region
    $region18: #{tpu_custom_call.1} parent=1 // pred_check
      _
    $region19: #{tpu_custom_call.1} parent=1 // pred_check_branch
      %73 = sbr.rel (0) target = $region21
    $region20: #{tpu_custom_call.1} parent=1 // pred_region
      _
    $region21: #{tpu_custom_call.1} parent=1 // pred_fallthru
      _
    // Predicated region
    $region22: #{tpu_custom_call.1} parent=1 // pred_check
      _
    $region23: #{tpu_custom_call.1} parent=1 // pred_check_branch
      %75 = sbr.rel (0) target = $region25
    $region24: #{tpu_custom_call.1} parent=1 // pred_region
      _
    $region25: #{tpu_custom_call.1} parent=1 // pred_fallthru
      _
    %76 = vsyncpa [#allocation3], 1

</llo_original>
